<compile_context>
chip_gen: v6e
topology: v6e:2x2x1
jax: 0.10.0
libtpu: 0.0.40
codegen_flags: <defaults>
</compile_context>

<pallas_src>
import functools

import jax
import jax.numpy as jnp
from jax.experimental import pallas as pl
from jax.experimental.pallas import tpu as pltpu


def _round_up(n, m):
    return ((n + m - 1) // m) * m


# ---------------------------------------------------------------------------
# Fused kernel: all blocks of the linearNet in one body.
#   refs = (x_ref, w1_0, b1_0, w2_0, b2_0, ..., w1_{B-1}, ..., o_ref)
# The activation stays in vregs/VMEM between blocks; only x tile in and out
# tile out touch HBM.
# ---------------------------------------------------------------------------
def _fused_linear_net_kernel(num_blocks, x_ref, *refs):
    o_ref = refs[-1]
    p_refs = refs[:-1]

    h = x_ref[...].astype(jnp.float32)
    for i in range(num_blocks):
        w1, b1, w2, b2 = p_refs[4 * i: 4 * i + 4]
        # Linear 1 (MXU, f32 accumulation) + bias + ReLU on the f32 accumulator.
        a = jnp.dot(h.astype(w1.dtype), w1[...],
                    preferred_element_type=jnp.float32)
        a = jnp.maximum(a + b1[...].astype(jnp.float32), 0.0)
        # Linear 2 (MXU, f32 accumulation) + bias.
        h = jnp.dot(a.astype(w2.dtype), w2[...],
                    preferred_element_type=jnp.float32)
        h = h + b2[...].astype(jnp.float32)
    o_ref[...] = h.astype(o_ref.dtype)


# ---------------------------------------------------------------------------
# Wrapper: pad to lane-dense shapes, tile the batch, run ONE pallas_call.
# ---------------------------------------------------------------------------
def linear_net_forward(x, params, *, tm_max=128, param_dtype=None):
    """Forward pass of linearNet.

    params: list of (w1, b1, w2, b2) per block, with
        w1: (in,  mid)   b1: (1, mid)
        w2: (mid, out)   b2: (1, out)
    """
    num_blocks = len(params)
    batch, infeature = x.shape
    outfeature = params[-1][2].shape[1]

    # Lane-dense padded feature dims (multiples of 128).
    in_p = _round_up(infeature, 128)
    out_p = _round_up(outfeature, 128)

    # Batch tile: multiple of 8 sublanes; cap at tm_max; pad batch to a
    # multiple of the tile so the grid divides exactly.
    tm = min(tm_max, _round_up(batch, 8))
    batch_p = _round_up(batch, tm)
    grid = (batch_p // tm,)

    x_p = jnp.pad(x, ((0, batch_p - batch), (0, in_p - infeature)))

    # Zero-pad weights/biases; zero pads keep the math exact.
    padded_params = []
    cur_in_p = in_p
    for (w1, b1, w2, b2) in params:
        in_d, mid = w1.shape
        out_d = w2.shape[1]
        mid_p = _round_up(mid, 128)
        if param_dtype is not None:
            w1 = w1.astype(param_dtype)
            w2 = w2.astype(param_dtype)
        padded_params += [
            jnp.pad(w1, ((0, cur_in_p - in_d), (0, mid_p - mid))),
            jnp.pad(b1, ((0, 0), (0, mid_p - mid))),
            jnp.pad(w2, ((0, mid_p - mid), (0, out_p - out_d))),
            jnp.pad(b2, ((0, 0), (0, out_p - out_d))),
        ]
        cur_in_p = out_p  # next block's input width

    # BlockSpecs: x/out are batch-tiled; weights/biases are full-array blocks
    # with constant index_maps -> VMEM-resident across all batch tiles.
    in_specs = [pl.BlockSpec((tm, in_p), lambda i: (i, 0))]
    for arr in padded_params:
        in_specs.append(pl.BlockSpec(arr.shape, lambda i: (0, 0)))
    out_spec = pl.BlockSpec((tm, out_p), lambda i: (i, 0))

    out_padded = pl.pallas_call(
        functools.partial(_fused_linear_net_kernel, num_blocks),
        out_shape=jax.ShapeDtypeStruct((batch_p, out_p), x.dtype),
        grid=grid,
        in_specs=in_specs,
        out_specs=out_spec,
        compiler_params=pltpu.CompilerParams(
            dimension_semantics=("parallel",),
            vmem_limit_bytes=64 * 1024 * 1024,
        ),
    )(x_p, *padded_params)

    return out_padded[:batch, :outfeature]


linear_net_forward_jit = jax.jit(linear_net_forward)


# ---------------------------------------------------------------------------
# Parameter init (PyTorch-style nn.Linear init) and pure-JAX reference.
# ---------------------------------------------------------------------------
def init_linear(key, fan_in, fan_out, dtype=jnp.float32):
    kw, kb = jax.random.split(key)
    bound = 1.0 / jnp.sqrt(jnp.array(fan_in, dtype))
    w = jax.random.uniform(kw, (fan_in, fan_out), dtype, -bound, bound)
    b = jax.random.uniform(kb, (1, fan_out), dtype, -bound, bound)
    return w, b


def init_linear_net(key, infeature, outfeature, mid_dim, num_blocks):
    params = []
    in_ch = infeature
    for _ in range(num_blocks):
        k1, k2, key = jax.random.split(key, 3)
        w1, b1 = init_linear(k1, in_ch, mid_dim)
        w2, b2 = init_linear(k2, mid_dim, outfeature)
        params.append((w1, b1, w2, b2))
        in_ch = outfeature  # mirrors make_layer: in_channels = out_channels
    return params


def reference_forward(x, params):
    out = x
    for (w1, b1, w2, b2) in params:
        out = jnp.maximum(out @ w1 + b1, 0.0) @ w2 + b2
    return out


if __name__ == "__main__":
    key = jax.random.PRNGKey(0)

    # Small shapes consistent with the module's forward (pure linear net).
    batch, infeature, outfeature, mid_dim, num_blocks = 8, 16, 32, 64, 2

    kx, kp, kx2 = jax.random.split(key, 3)
    x = jax.random.normal(kx, (batch, infeature), jnp.float32)
    params = init_linear_net(kp, infeature, outfeature, mid_dim, num_blocks)

    out = linear_net_forward_jit(x, params)
    out = jax.block_until_ready(out)
    ref = reference_forward(x, params)
    assert out.shape == (batch, outfeature)
    assert jnp.allclose(out, ref, atol=1e-4, rtol=1e-4), "mismatch (small batch)"

    # Second check: batch larger than one tile -> exercises the batch grid,
    # padding and slicing path.
    batch2 = 200
    x2 = jax.random.normal(kx2, (batch2, infeature), jnp.float32)
    out2 = jax.block_until_ready(linear_net_forward_jit(x2, params))
    ref2 = reference_forward(x2, params)
    assert out2.shape == (batch2, outfeature)
    assert jnp.allclose(out2, ref2, atol=1e-4, rtol=1e-4), "mismatch (tiled batch)"

    print("KERNEL_OK")
</pallas_src>

<mosaic_0001>
module attributes {stable_mosaic.version = 11 : i64} {
  func.func @_fused_linear_net_kernel(%arg0: i32, %arg1: memref<8x128xf32, #tpu.memory_space<vmem>>, %arg2: memref<128x128xf32, #tpu.memory_space<vmem>>, %arg3: memref<1x128xf32, #tpu.memory_space<vmem>>, %arg4: memref<128x128xf32, #tpu.memory_space<vmem>>, %arg5: memref<1x128xf32, #tpu.memory_space<vmem>>, %arg6: memref<128x128xf32, #tpu.memory_space<vmem>>, %arg7: memref<1x128xf32, #tpu.memory_space<vmem>>, %arg8: memref<128x128xf32, #tpu.memory_space<vmem>>, %arg9: memref<1x128xf32, #tpu.memory_space<vmem>>, %arg10: memref<8x128xf32, #tpu.memory_space<vmem>>) attributes {dimension_semantics = [#tpu.dimension_semantics<parallel>], iteration_bounds = array<i64: 1>, scalar_prefetch = 0 : i64, scratch_operands = 0 : i64, tpu.core_type = #tpu.core_type<tc>, window_params = [{transform_indices = @transform_0, window_bounds = array<i64: 8, 128>}, {pipeline_mode = #tpu.pipeline_mode<synchronous>, transform_indices = @transform_1, window_bounds = array<i64: 128, 128>}, {pipeline_mode = #tpu.pipeline_mode<synchronous>, transform_indices = @transform_2, window_bounds = array<i64: 1, 128>}, {pipeline_mode = #tpu.pipeline_mode<synchronous>, transform_indices = @transform_3, window_bounds = array<i64: 128, 128>}, {pipeline_mode = #tpu.pipeline_mode<synchronous>, transform_indices = @transform_4, window_bounds = array<i64: 1, 128>}, {pipeline_mode = #tpu.pipeline_mode<synchronous>, transform_indices = @transform_5, window_bounds = array<i64: 128, 128>}, {pipeline_mode = #tpu.pipeline_mode<synchronous>, transform_indices = @transform_6, window_bounds = array<i64: 1, 128>}, {pipeline_mode = #tpu.pipeline_mode<synchronous>, transform_indices = @transform_7, window_bounds = array<i64: 128, 128>}, {pipeline_mode = #tpu.pipeline_mode<synchronous>, transform_indices = @transform_8, window_bounds = array<i64: 1, 128>}, {transform_indices = @transform_9, window_bounds = array<i64: 8, 128>}]} {
    %c0 = arith.constant 0 : index
    %c0_0 = arith.constant 0 : index
    %0 = vector.load %arg1[%c0, %c0_0] : memref<8x128xf32, #tpu.memory_space<vmem>>, vector<8x128xf32>
    %c0_1 = arith.constant 0 : index
    %c0_2 = arith.constant 0 : index
    %1 = vector.load %arg2[%c0_1, %c0_2] : memref<128x128xf32, #tpu.memory_space<vmem>>, vector<128x128xf32>
    %cst = arith.constant dense<0.000000e+00> : vector<8x128xf32>
    %2 = tpu.matmul %0, %1, %cst {dimension_numbers = #tpu.dot_dimension_numbers<[1], [0], [0], [1], [0, 0, 1, 1], [], []>} : vector<8x128xf32>, vector<128x128xf32>, vector<8x128xf32> -> vector<8x128xf32>
    %c0_3 = arith.constant 0 : index
    %c0_4 = arith.constant 0 : index
    %3 = vector.load %arg3[%c0_3, %c0_4] : memref<1x128xf32, #tpu.memory_space<vmem>>, vector<1x128xf32>
    %4 = vector.broadcast %3 : vector<1x128xf32> to vector<8x128xf32>
    %5 = arith.addf %2, %4 : vector<8x128xf32>
    %cst_5 = arith.constant 0.000000e+00 : f32
    %6 = vector.broadcast %cst_5 : f32 to vector<8x128xf32>
    %7 = arith.maximumf %5, %6 : vector<8x128xf32>
    %c0_6 = arith.constant 0 : index
    %c0_7 = arith.constant 0 : index
    %8 = vector.load %arg4[%c0_6, %c0_7] : memref<128x128xf32, #tpu.memory_space<vmem>>, vector<128x128xf32>
    %cst_8 = arith.constant dense<0.000000e+00> : vector<8x128xf32>
    %9 = tpu.matmul %7, %8, %cst_8 {dimension_numbers = #tpu.dot_dimension_numbers<[1], [0], [0], [1], [0, 0, 1, 1], [], []>} : vector<8x128xf32>, vector<128x128xf32>, vector<8x128xf32> -> vector<8x128xf32>
    %c0_9 = arith.constant 0 : index
    %c0_10 = arith.constant 0 : index
    %10 = vector.load %arg5[%c0_9, %c0_10] : memref<1x128xf32, #tpu.memory_space<vmem>>, vector<1x128xf32>
    %11 = vector.broadcast %10 : vector<1x128xf32> to vector<8x128xf32>
    %12 = arith.addf %9, %11 : vector<8x128xf32>
    %c0_11 = arith.constant 0 : index
    %c0_12 = arith.constant 0 : index
    %13 = vector.load %arg6[%c0_11, %c0_12] : memref<128x128xf32, #tpu.memory_space<vmem>>, vector<128x128xf32>
    %cst_13 = arith.constant dense<0.000000e+00> : vector<8x128xf32>
    %14 = tpu.matmul %12, %13, %cst_13 {dimension_numbers = #tpu.dot_dimension_numbers<[1], [0], [0], [1], [0, 0, 1, 1], [], []>} : vector<8x128xf32>, vector<128x128xf32>, vector<8x128xf32> -> vector<8x128xf32>
    %c0_14 = arith.constant 0 : index
    %c0_15 = arith.constant 0 : index
    %15 = vector.load %arg7[%c0_14, %c0_15] : memref<1x128xf32, #tpu.memory_space<vmem>>, vector<1x128xf32>
    %16 = vector.broadcast %15 : vector<1x128xf32> to vector<8x128xf32>
    %17 = arith.addf %14, %16 : vector<8x128xf32>
    %cst_16 = arith.constant 0.000000e+00 : f32
    %18 = vector.broadcast %cst_16 : f32 to vector<8x128xf32>
    %19 = arith.maximumf %17, %18 : vector<8x128xf32>
    %c0_17 = arith.constant 0 : index
    %c0_18 = arith.constant 0 : index
    %20 = vector.load %arg8[%c0_17, %c0_18] : memref<128x128xf32, #tpu.memory_space<vmem>>, vector<128x128xf32>
    %cst_19 = arith.constant dense<0.000000e+00> : vector<8x128xf32>
    %21 = tpu.matmul %19, %20, %cst_19 {dimension_numbers = #tpu.dot_dimension_numbers<[1], [0], [0], [1], [0, 0, 1, 1], [], []>} : vector<8x128xf32>, vector<128x128xf32>, vector<8x128xf32> -> vector<8x128xf32>
    %c0_20 = arith.constant 0 : index
    %c0_21 = arith.constant 0 : index
    %22 = vector.load %arg9[%c0_20, %c0_21] : memref<1x128xf32, #tpu.memory_space<vmem>>, vector<1x128xf32>
    %23 = vector.broadcast %22 : vector<1x128xf32> to vector<8x128xf32>
    %24 = arith.addf %21, %23 : vector<8x128xf32>
    %c0_22 = arith.constant 0 : index
    %c0_23 = arith.constant 0 : index
    %25 = vector.load %arg10[%c0_22, %c0_23] : memref<8x128xf32, #tpu.memory_space<vmem>>, vector<8x128xf32>
    tpu.vector_store %arg10[%c0_22, %c0_23], %24 {strides = array<i32>} : memref<8x128xf32, #tpu.memory_space<vmem>>, vector<8x128xf32>,
    return
  }
  func.func @transform_0(%arg0: i32) -> (i32, i32) {
    %c0_i32 = arith.constant 0 : i32
    %c0_i32_0 = arith.constant 0 : i32
    return %arg0, %c0_i32 : i32, i32
  }
  func.func @transform_1(%arg0: i32) -> (i32, i32) {
    %c0_i32 = arith.constant 0 : i32
    %c0_i32_0 = arith.constant 0 : i32
    %c0_i32_1 = arith.constant 0 : i32
    return %c0_i32, %c0_i32_0 : i32, i32
  }
  func.func @transform_2(%arg0: i32) -> (i32, i32) {
    %c0_i32 = arith.constant 0 : i32
    %c0_i32_0 = arith.constant 0 : i32
    %c0_i32_1 = arith.constant 0 : i32
    return %c0_i32, %c0_i32_0 : i32, i32
  }
  func.func @transform_3(%arg0: i32) -> (i32, i32) {
    %c0_i32 = arith.constant 0 : i32
    %c0_i32_0 = arith.constant 0 : i32
    %c0_i32_1 = arith.constant 0 : i32
    return %c0_i32, %c0_i32_0 : i32, i32
  }
  func.func @transform_4(%arg0: i32) -> (i32, i32) {
    %c0_i32 = arith.constant 0 : i32
    %c0_i32_0 = arith.constant 0 : i32
    %c0_i32_1 = arith.constant 0 : i32
    return %c0_i32, %c0_i32_0 : i32, i32
  }
  func.func @transform_5(%arg0: i32) -> (i32, i32) {
    %c0_i32 = arith.constant 0 : i32
    %c0_i32_0 = arith.constant 0 : i32
    %c0_i32_1 = arith.constant 0 : i32
    return %c0_i32, %c0_i32_0 : i32, i32
  }
  func.func @transform_6(%arg0: i32) -> (i32, i32) {
    %c0_i32 = arith.constant 0 : i32
    %c0_i32_0 = arith.constant 0 : i32
    %c0_i32_1 = arith.constant 0 : i32
    return %c0_i32, %c0_i32_0 : i32, i32
  }
  func.func @transform_7(%arg0: i32) -> (i32, i32) {
    %c0_i32 = arith.constant 0 : i32
    %c0_i32_0 = arith.constant 0 : i32
    %c0_i32_1 = arith.constant 0 : i32
    return %c0_i32, %c0_i32_0 : i32, i32
  }
  func.func @transform_8(%arg0: i32) -> (i32, i32) {
    %c0_i32 = arith.constant 0 : i32
    %c0_i32_0 = arith.constant 0 : i32
    %c0_i32_1 = arith.constant 0 : i32
    return %c0_i32, %c0_i32_0 : i32, i32
  }
  func.func @transform_9(%arg0: i32) -> (i32, i32) {
    %c0_i32 = arith.constant 0 : i32
    %c0_i32_0 = arith.constant 0 : i32
    return %arg0, %c0_i32 : i32, i32
  }
}

</mosaic_0001>

<llo_original>
// kernel: linear_net_forward.1
$region0: #{linear_net_forward.1}
  #allocation0 [shape = 'u32[]', space=smem, size = 0x4, offset = 0x4, fixed_abs, tag = 'smem constant byte address 0x4 - core index']
  #allocation1 [shape = 'u32[144,128]{1,0:T(1,128)}', space=vmem, size = 0x12000, scoped, tag = 'internal scratch']
  %s0 = inlined_call_operand.vmem [shape: f32[8,128], index: 0, kind: input, shape index: {}]
  %s1 = inlined_call_operand.vmem [shape: f32[128,128], index: 1, kind: input, shape index: {}]
  %s2 = inlined_call_operand.vmem [shape: f32[1,128], index: 2, kind: input, shape index: {}]
  %s3 = inlined_call_operand.vmem [shape: f32[128,128], index: 3, kind: input, shape index: {}]
  %s4 = inlined_call_operand.vmem [shape: f32[1,128], index: 4, kind: input, shape index: {}]
  %s5 = inlined_call_operand.vmem [shape: f32[128,128], index: 5, kind: input, shape index: {}]
  %s6 = inlined_call_operand.vmem [shape: f32[1,128], index: 6, kind: input, shape index: {}]
  %s7 = inlined_call_operand.vmem [shape: f32[128,128], index: 7, kind: input, shape index: {}]
  %s8 = inlined_call_operand.vmem [shape: f32[1,128], index: 8, kind: input, shape index: {}]
  %s9 = inlined_call_operand.hbm [shape: f32[8,128], index: 9, kind: output, shape index: {}]
  %s10 = sld [smem:[#allocation0]]
  $region46: #{linear_net_forward.1} parent=0
    _
  %s12 = ssub.s32 1, %s10
  %s13 = scalar_select 0, %s12, %s10
  $region1: #{linear_net_forward.1} parent=0
    #allocation2 [shape = 'u8[4096]{0}', space=vmem, size = 0x1000, scoped, tag = 'output window, operand 0, single buffered']
    #allocation3 [shape = 's32[1]{0}', space=sflag, size = 0x4, scoped, tag = 'scoped memory for linear_net_forward.1']
    %14 = vsyncpa [#allocation3], 0
    // Predicated region
    $region2: #{linear_net_forward.1} parent=1 // pred_check
      _
    $region3: #{linear_net_forward.1} parent=1 // pred_check_branch
      %16 = sbr.rel (0) target = $region5
    $region4: #{linear_net_forward.1} parent=1 // pred_region
      _
    $region5: #{linear_net_forward.1} parent=1 // pred_fallthru
      _
    // Predicated region
    $region6: #{linear_net_forward.1} parent=1 // pred_check
      _
    $region7: #{linear_net_forward.1} parent=1 // pred_check_branch
      %18 = sbr.rel (0) target = $region9
    $region8: #{linear_net_forward.1} parent=1 // pred_region
      _
    $region9: #{linear_net_forward.1} parent=1 // pred_fallthru
      _
    // Predicated region
    $region10: #{linear_net_forward.1} parent=1 // pred_check
      _
    $region11: #{linear_net_forward.1} parent=1 // pred_check_branch
      %20 = sbr.rel (0) target = $region13
    $region12: #{linear_net_forward.1} parent=1 // pred_region
      _
    $region13: #{linear_net_forward.1} parent=1 // pred_fallthru
      _
    // Predicated region
    $region14: #{linear_net_forward.1} parent=1 // pred_check
      _
    $region15: #{linear_net_forward.1} parent=1 // pred_check_branch
      %22 = sbr.rel (0) target = $region17
    $region16: #{linear_net_forward.1} parent=1 // pred_region
      _
    $region17: #{linear_net_forward.1} parent=1 // pred_fallthru
      _
    // Predicated region
    $region18: #{linear_net_forward.1} parent=1 // pred_check
      _
    $region19: #{linear_net_forward.1} parent=1 // pred_check_branch
      %24 = sbr.rel (0) target = $region21
    $region20: #{linear_net_forward.1} parent=1 // pred_region
      _
    $region21: #{linear_net_forward.1} parent=1 // pred_fallthru
      _
    // Predicated region
    $region22: #{linear_net_forward.1} parent=1 // pred_check
      _
    $region23: #{linear_net_forward.1} parent=1 // pred_check_branch
      %26 = sbr.rel (0) target = $region25
    $region24: #{linear_net_forward.1} parent=1 // pred_region
      _
    $region25: #{linear_net_forward.1} parent=1 // pred_fallthru
      _
    // Predicated region
    $region26: #{linear_net_forward.1} parent=1 // pred_check
      _
    $region27: #{linear_net_forward.1} parent=1 // pred_check_branch
      %28 = sbr.rel (0) target = $region29
    $region28: #{linear_net_forward.1} parent=1 // pred_region
      _
    $region29: #{linear_net_forward.1} parent=1 // pred_fallthru
      _
    // Predicated region
    $region30: #{linear_net_forward.1} parent=1 // pred_check
      _
    $region31: #{linear_net_forward.1} parent=1 // pred_check_branch
      %30 = sbr.rel (0) target = $region33
    $region32: #{linear_net_forward.1} parent=1 // pred_region
      _
    $region33: #{linear_net_forward.1} parent=1 // pred_fallthru
      _
    // Predicated region
    $region34: #{linear_net_forward.1} parent=1 // pred_check
      _
    $region35: #{linear_net_forward.1} parent=1 // pred_check_branch
      %32 = sbr.rel (0) target = $region37
    $region36: #{linear_net_forward.1} parent=1 // pred_region
      _
    $region37: #{linear_net_forward.1} parent=1 // pred_fallthru
      _
    %v33 = vld [vmem:[%s0] sm:$0xff]
    %v34 = vld [vmem:[%s1] sm:$0xff]
    %v35 = vld [vmem:[%s1 + $0x8] sm:$0xff]
    %v36 = vld [vmem:[%s1 + $0x10] sm:$0xff]
    %v37 = vld [vmem:[%s1 + $0x18] sm:$0xff]
    %v38 = vld [vmem:[%s1 + $0x20] sm:$0xff]
    %v39 = vld [vmem:[%s1 + $0x28] sm:$0xff]
    %v40 = vld [vmem:[%s1 + $0x30] sm:$0xff]
    %v41 = vld [vmem:[%s1 + $0x38] sm:$0xff]
    %v42 = vld [vmem:[%s1 + $0x40] sm:$0xff]
    %v43 = vld [vmem:[%s1 + $0x48] sm:$0xff]
    %v44 = vld [vmem:[%s1 + $0x50] sm:$0xff]
    %v45 = vld [vmem:[%s1 + $0x58] sm:$0xff]
    %v46 = vld [vmem:[%s1 + $0x60] sm:$0xff]
    %v47 = vld [vmem:[%s1 + $0x68] sm:$0xff]
    %v48 = vld [vmem:[%s1 + $0x70] sm:$0xff]
    %v49 = vld [vmem:[%s1 + $0x78] sm:$0xff]
    %v50 = vld [vmem:[%s2] sm:$0x1]
    %v52 = vlaneseq
    %v53 = vshrl.u32 %v52, 7
    %v54 = vsub.s32 0, %v53
    %v55 = vrot.slane %v50, %v54
    %57 = vmatprep.subr.mxu0 0.0
    %58 = vmatpush1.msra.mxu0 %v49
    %59 = vmatprep.subr.mxu0 0.0
    %60 = vmatpush1.msra.mxu0 %v48
    %61 = vmatprep.subr.mxu0 0.0
    %62 = vmatpush1.msra.mxu0 %v47
    %63 = vmatprep.subr.mxu0 0.0
    %64 = vmatpush1.msra.mxu0 %v46
    %65 = vmatprep.subr.mxu0 0.0
    %66 = vmatpush1.msra.mxu0 %v45
    %67 = vmatprep.subr.mxu0 0.0
    %68 = vmatpush1.msra.mxu0 %v44
    %69 = vmatprep.subr.mxu0 0.0
    %70 = vmatpush1.msra.mxu0 %v43
    %71 = vmatprep.subr.mxu0 0.0
    %72 = vmatpush1.msra.mxu0 %v42
    %73 = vmatprep.subr.mxu0 0.0
    %74 = vmatpush1.msra.mxu0 %v41
    %75 = vmatprep.subr.mxu0 0.0
    %76 = vmatpush1.msra.mxu0 %v40
    %77 = vmatprep.subr.mxu0 0.0
    %78 = vmatpush1.msra.mxu0 %v39
    %79 = vmatprep.subr.mxu0 0.0
    %80 = vmatpush1.msra.mxu0 %v38
    %81 = vmatprep.subr.mxu0 0.0
    %82 = vmatpush1.msra.mxu0 %v37
    %83 = vmatprep.subr.mxu0 0.0
    %84 = vmatpush1.msra.mxu0 %v36
    %85 = vmatprep.subr.mxu0 0.0
    %86 = vmatpush1.msra.mxu0 %v35
    %87 = vmatprep.subr.mxu0 0.0
    %88 = vmatpush1.msra.mxu0 %v34
    %89 = vmatprep.subr.mxu0 0.0
    %90 = vmatpush2.msra.mxu0 0.0
    %91 = vmatprep.subr.mxu0 0.0
    %92 = vmatpush2.msra.mxu0 0.0
    %93 = vmatprep.subr.mxu0 0.0
    %94 = vmatpush2.msra.mxu0 0.0
    %95 = vmatprep.subr.mxu0 0.0
    %96 = vmatpush2.msra.mxu0 0.0
    %97 = vmatprep.subr.mxu0 0.0
    %98 = vmatpush2.msra.mxu0 0.0
    %99 = vmatprep.subr.mxu0 0.0
    %100 = vmatpush2.msra.mxu0 0.0
    %101 = vmatprep.subr.mxu0 0.0
    %102 = vmatpush2.msra.mxu0 0.0
    %103 = vmatprep.subr.mxu0 0.0
    %104 = vmatpush2.msra.mxu0 0.0
    %105 = vmatprep.subr.mxu0 0.0
    %106 = vmatpush2.msra.mxu0 0.0
    %107 = vmatprep.subr.mxu0 0.0
    %108 = vmatpush2.msra.mxu0 0.0
    %109 = vmatprep.subr.mxu0 0.0
    %110 = vmatpush2.msra.mxu0 0.0
    %111 = vmatprep.subr.mxu0 0.0
    %112 = vmatpush2.msra.mxu0 0.0
    %113 = vmatprep.subr.mxu0 0.0
    %114 = vmatpush2.msra.mxu0 0.0
    %115 = vmatprep.subr.mxu0 0.0
    %116 = vmatpush2.msra.mxu0 0.0
    %117 = vmatprep.subr.mxu0 0.0
    %118 = vmatpush2.msra.mxu0 0.0
    %119 = vmatprep.subr.mxu0 0.0
    %120 = vmatpush2.msra.mxu0 0.0
    %121 = vmatprep.mubr.f32.mxu0 0.0
    %122 = vmatmul.mubr.f32.gmra.mxu0 %v33
    %v123 = vpop.f32.mrf.mxu0
    %v124 = vadd.f32 %v55, %v123
    %v125 = vpop.f32.mrf.mxu0
    %126 = vdwg.mxu0
    %v127 = vmax.f32 %v124, 0.0
    %v128 = vld [vmem:[%s3] sm:$0xff]
    %v129 = vld [vmem:[%s3 + $0x8] sm:$0xff]
    %v130 = vld [vmem:[%s3 + $0x10] sm:$0xff]
    %v131 = vld [vmem:[%s3 + $0x18] sm:$0xff]
    %v132 = vld [vmem:[%s3 + $0x20] sm:$0xff]
    %v133 = vld [vmem:[%s3 + $0x28] sm:$0xff]
    %v134 = vld [vmem:[%s3 + $0x30] sm:$0xff]
    %v135 = vld [vmem:[%s3 + $0x38] sm:$0xff]
    %v136 = vld [vmem:[%s3 + $0x40] sm:$0xff]
    %v137 = vld [vmem:[%s3 + $0x48] sm:$0xff]
    %v138 = vld [vmem:[%s3 + $0x50] sm:$0xff]
    %v139 = vld [vmem:[%s3 + $0x58] sm:$0xff]
    %v140 = vld [vmem:[%s3 + $0x60] sm:$0xff]
    %v141 = vld [vmem:[%s3 + $0x68] sm:$0xff]
    %v142 = vld [vmem:[%s3 + $0x70] sm:$0xff]
    %v143 = vld [vmem:[%s3 + $0x78] sm:$0xff]
    %v144 = vld [vmem:[%s4] sm:$0x1]
    %v146 = vlaneseq
    %v147 = vshrl.u32 %v146, 7
    %v148 = vsub.s32 0, %v147
    %v149 = vrot.slane %v144, %v148
    %151 = vmatprep.subr.mxu0 0.0
    %152 = vmatpush1.msra.mxu0 %v143
    %153 = vmatprep.subr.mxu0 0.0
    %154 = vmatpush1.msra.mxu0 %v142
    %155 = vmatprep.subr.mxu0 0.0
    %156 = vmatpush1.msra.mxu0 %v141
    %157 = vmatprep.subr.mxu0 0.0
    %158 = vmatpush1.msra.mxu0 %v140
    %159 = vmatprep.subr.mxu0 0.0
    %160 = vmatpush1.msra.mxu0 %v139
    %161 = vmatprep.subr.mxu0 0.0
    %162 = vmatpush1.msra.mxu0 %v138
    %163 = vmatprep.subr.mxu0 0.0
    %164 = vmatpush1.msra.mxu0 %v137
    %165 = vmatprep.subr.mxu0 0.0
    %166 = vmatpush1.msra.mxu0 %v136
    %167 = vmatprep.subr.mxu0 0.0
    %168 = vmatpush1.msra.mxu0 %v135
    %169 = vmatprep.subr.mxu0 0.0
    %170 = vmatpush1.msra.mxu0 %v134
    %171 = vmatprep.subr.mxu0 0.0
    %172 = vmatpush1.msra.mxu0 %v133
    %173 = vmatprep.subr.mxu0 0.0
    %174 = vmatpush1.msra.mxu0 %v132
    %175 = vmatprep.subr.mxu0 0.0
    %176 = vmatpush1.msra.mxu0 %v131
    %177 = vmatprep.subr.mxu0 0.0
    %178 = vmatpush1.msra.mxu0 %v130
    %179 = vmatprep.subr.mxu0 0.0
    %180 = vmatpush1.msra.mxu0 %v129
    %181 = vmatprep.subr.mxu0 0.0
    %182 = vmatpush1.msra.mxu0 %v128
    %183 = vmatprep.subr.mxu0 0.0
    %184 = vmatpush2.msra.mxu0 0.0
    %185 = vmatprep.subr.mxu0 0.0
    %186 = vmatpush2.msra.mxu0 0.0
    %187 = vmatprep.subr.mxu0 0.0
    %188 = vmatpush2.msra.mxu0 0.0
    %189 = vmatprep.subr.mxu0 0.0
    %190 = vmatpush2.msra.mxu0 0.0
    %191 = vmatprep.subr.mxu0 0.0
    %192 = vmatpush2.msra.mxu0 0.0
    %193 = vmatprep.subr.mxu0 0.0
    %194 = vmatpush2.msra.mxu0 0.0
    %195 = vmatprep.subr.mxu0 0.0
    %196 = vmatpush2.msra.mxu0 0.0
    %197 = vmatprep.subr.mxu0 0.0
    %198 = vmatpush2.msra.mxu0 0.0
    %199 = vmatprep.subr.mxu0 0.0
    %200 = vmatpush2.msra.mxu0 0.0
    %201 = vmatprep.subr.mxu0 0.0
    %202 = vmatpush2.msra.mxu0 0.0
    %203 = vmatprep.subr.mxu0 0.0
    %204 = vmatpush2.msra.mxu0 0.0
    %205 = vmatprep.subr.mxu0 0.0
    %206 = vmatpush2.msra.mxu0 0.0
    %207 = vmatprep.subr.mxu0 0.0
    %208 = vmatpush2.msra.mxu0 0.0
    %209 = vmatprep.subr.mxu0 0.0
    %210 = vmatpush2.msra.mxu0 0.0
    %211 = vmatprep.subr.mxu0 0.0
    %212 = vmatpush2.msra.mxu0 0.0
    %213 = vmatprep.subr.mxu0 0.0
    %214 = vmatpush2.msra.mxu0 0.0
    %215 = vmatprep.mubr.f32.mxu0 0.0
    %216 = vmatmul.mubr.f32.gmra.mxu0 %v127
    %v217 = vpop.f32.mrf.mxu0
    %v218 = vadd.f32 %v149, %v217
    %v219 = vpop.f32.mrf.mxu0
    %220 = vdwg.mxu0
    %v221 = vld [vmem:[%s5] sm:$0xff]
    %v222 = vld [vmem:[%s5 + $0x8] sm:$0xff]
    %v223 = vld [vmem:[%s5 + $0x10] sm:$0xff]
    %v224 = vld [vmem:[%s5 + $0x18] sm:$0xff]
    %v225 = vld [vmem:[%s5 + $0x20] sm:$0xff]
    %v226 = vld [vmem:[%s5 + $0x28] sm:$0xff]
    %v227 = vld [vmem:[%s5 + $0x30] sm:$0xff]
    %v228 = vld [vmem:[%s5 + $0x38] sm:$0xff]
    %v229 = vld [vmem:[%s5 + $0x40] sm:$0xff]
    %v230 = vld [vmem:[%s5 + $0x48] sm:$0xff]
    %v231 = vld [vmem:[%s5 + $0x50] sm:$0xff]
    %v232 = vld [vmem:[%s5 + $0x58] sm:$0xff]
    %v233 = vld [vmem:[%s5 + $0x60] sm:$0xff]
    %v234 = vld [vmem:[%s5 + $0x68] sm:$0xff]
    %v235 = vld [vmem:[%s5 + $0x70] sm:$0xff]
    %v236 = vld [vmem:[%s5 + $0x78] sm:$0xff]
    %v237 = vld [vmem:[%s6] sm:$0x1]
    %v239 = vlaneseq
    %v240 = vshrl.u32 %v239, 7
    %v241 = vsub.s32 0, %v240
    %v242 = vrot.slane %v237, %v241
    %244 = vmatprep.subr.mxu0 0.0
    %245 = vmatpush1.msra.mxu0 %v236
    %246 = vmatprep.subr.mxu0 0.0
    %247 = vmatpush1.msra.mxu0 %v235
    %248 = vmatprep.subr.mxu0 0.0
    %249 = vmatpush1.msra.mxu0 %v234
    %250 = vmatprep.subr.mxu0 0.0
    %251 = vmatpush1.msra.mxu0 %v233
    %252 = vmatprep.subr.mxu0 0.0
    %253 = vmatpush1.msra.mxu0 %v232
    %254 = vmatprep.subr.mxu0 0.0
    %255 = vmatpush1.msra.mxu0 %v231
    %256 = vmatprep.subr.mxu0 0.0
    %257 = vmatpush1.msra.mxu0 %v230
    %258 = vmatprep.subr.mxu0 0.0
    %259 = vmatpush1.msra.mxu0 %v229
    %260 = vmatprep.subr.mxu0 0.0
    %261 = vmatpush1.msra.mxu0 %v228
    %262 = vmatprep.subr.mxu0 0.0
    %263 = vmatpush1.msra.mxu0 %v227
    %264 = vmatprep.subr.mxu0 0.0
    %265 = vmatpush1.msra.mxu0 %v226
    %266 = vmatprep.subr.mxu0 0.0
    %267 = vmatpush1.msra.mxu0 %v225
    %268 = vmatprep.subr.mxu0 0.0
    %269 = vmatpush1.msra.mxu0 %v224
    %270 = vmatprep.subr.mxu0 0.0
    %271 = vmatpush1.msra.mxu0 %v223
    %272 = vmatprep.subr.mxu0 0.0
    %273 = vmatpush1.msra.mxu0 %v222
    %274 = vmatprep.subr.mxu0 0.0
    %275 = vmatpush1.msra.mxu0 %v221
    %276 = vmatprep.subr.mxu0 0.0
    %277 = vmatpush2.msra.mxu0 0.0
    %278 = vmatprep.subr.mxu0 0.0
    %279 = vmatpush2.msra.mxu0 0.0
    %280 = vmatprep.subr.mxu0 0.0
    %281 = vmatpush2.msra.mxu0 0.0
    %282 = vmatprep.subr.mxu0 0.0
    %283 = vmatpush2.msra.mxu0 0.0
    %284 = vmatprep.subr.mxu0 0.0
    %285 = vmatpush2.msra.mxu0 0.0
    %286 = vmatprep.subr.mxu0 0.0
    %287 = vmatpush2.msra.mxu0 0.0
    %288 = vmatprep.subr.mxu0 0.0
    %289 = vmatpush2.msra.mxu0 0.0
    %290 = vmatprep.subr.mxu0 0.0
    %291 = vmatpush2.msra.mxu0 0.0
    %292 = vmatprep.subr.mxu0 0.0
    %293 = vmatpush2.msra.mxu0 0.0
    %294 = vmatprep.subr.mxu0 0.0
    %295 = vmatpush2.msra.mxu0 0.0
    %296 = vmatprep.subr.mxu0 0.0
    %297 = vmatpush2.msra.mxu0 0.0
    %298 = vmatprep.subr.mxu0 0.0
    %299 = vmatpush2.msra.mxu0 0.0
    %300 = vmatprep.subr.mxu0 0.0
    %301 = vmatpush2.msra.mxu0 0.0
    %302 = vmatprep.subr.mxu0 0.0
    %303 = vmatpush2.msra.mxu0 0.0
    %304 = vmatprep.subr.mxu0 0.0
    %305 = vmatpush2.msra.mxu0 0.0
    %306 = vmatprep.subr.mxu0 0.0
    %307 = vmatpush2.msra.mxu0 0.0
    %308 = vmatprep.mubr.f32.mxu0 0.0
    %309 = vmatmul.mubr.f32.gmra.mxu0 %v218
    %v310 = vpop.f32.mrf.mxu0
    %v311 = vadd.f32 %v242, %v310
    %v312 = vpop.f32.mrf.mxu0
    %313 = vdwg.mxu0
    %v314 = vmax.f32 %v311, 0.0
    %v315 = vld [vmem:[%s7] sm:$0xff]
    %v316 = vld [vmem:[%s7 + $0x8] sm:$0xff]
    %v317 = vld [vmem:[%s7 + $0x10] sm:$0xff]
    %v318 = vld [vmem:[%s7 + $0x18] sm:$0xff]
    %v319 = vld [vmem:[%s7 + $0x20] sm:$0xff]
    %v320 = vld [vmem:[%s7 + $0x28] sm:$0xff]
    %v321 = vld [vmem:[%s7 + $0x30] sm:$0xff]
    %v322 = vld [vmem:[%s7 + $0x38] sm:$0xff]
    %v323 = vld [vmem:[%s7 + $0x40] sm:$0xff]
    %v324 = vld [vmem:[%s7 + $0x48] sm:$0xff]
    %v325 = vld [vmem:[%s7 + $0x50] sm:$0xff]
    %v326 = vld [vmem:[%s7 + $0x58] sm:$0xff]
    %v327 = vld [vmem:[%s7 + $0x60] sm:$0xff]
    %v328 = vld [vmem:[%s7 + $0x68] sm:$0xff]
    %v329 = vld [vmem:[%s7 + $0x70] sm:$0xff]
    %v330 = vld [vmem:[%s7 + $0x78] sm:$0xff]
    %v331 = vld [vmem:[%s8] sm:$0x1]
    %v333 = vlaneseq
    %v334 = vshrl.u32 %v333, 7
    %v335 = vsub.s32 0, %v334
    %v336 = vrot.slane %v331, %v335
    %338 = vmatprep.subr.mxu0 0.0
    %339 = vmatpush1.msra.mxu0 %v330
    %340 = vmatprep.subr.mxu0 0.0
    %341 = vmatpush1.msra.mxu0 %v329
    %342 = vmatprep.subr.mxu0 0.0
    %343 = vmatpush1.msra.mxu0 %v328
    %344 = vmatprep.subr.mxu0 0.0
    %345 = vmatpush1.msra.mxu0 %v327
    %346 = vmatprep.subr.mxu0 0.0
    %347 = vmatpush1.msra.mxu0 %v326
    %348 = vmatprep.subr.mxu0 0.0
    %349 = vmatpush1.msra.mxu0 %v325
    %350 = vmatprep.subr.mxu0 0.0
    %351 = vmatpush1.msra.mxu0 %v324
    %352 = vmatprep.subr.mxu0 0.0
    %353 = vmatpush1.msra.mxu0 %v323
    %354 = vmatprep.subr.mxu0 0.0
    %355 = vmatpush1.msra.mxu0 %v322
    %356 = vmatprep.subr.mxu0 0.0
    %357 = vmatpush1.msra.mxu0 %v321
    %358 = vmatprep.subr.mxu0 0.0
    %359 = vmatpush1.msra.mxu0 %v320
    %360 = vmatprep.subr.mxu0 0.0
    %361 = vmatpush1.msra.mxu0 %v319
    %362 = vmatprep.subr.mxu0 0.0
    %363 = vmatpush1.msra.mxu0 %v318
    %364 = vmatprep.subr.mxu0 0.0
    %365 = vmatpush1.msra.mxu0 %v317
    %366 = vmatprep.subr.mxu0 0.0
    %367 = vmatpush1.msra.mxu0 %v316
    %368 = vmatprep.subr.mxu0 0.0
    %369 = vmatpush1.msra.mxu0 %v315
    %370 = vmatprep.subr.mxu0 0.0
    %371 = vmatpush2.msra.mxu0 0.0
    %372 = vmatprep.subr.mxu0 0.0
    %373 = vmatpush2.msra.mxu0 0.0
    %374 = vmatprep.subr.mxu0 0.0
    %375 = vmatpush2.msra.mxu0 0.0
    %376 = vmatprep.subr.mxu0 0.0
    %377 = vmatpush2.msra.mxu0 0.0
    %378 = vmatprep.subr.mxu0 0.0
    %379 = vmatpush2.msra.mxu0 0.0
    %380 = vmatprep.subr.mxu0 0.0
    %381 = vmatpush2.msra.mxu0 0.0
    %382 = vmatprep.subr.mxu0 0.0
    %383 = vmatpush2.msra.mxu0 0.0
    %384 = vmatprep.subr.mxu0 0.0
    %385 = vmatpush2.msra.mxu0 0.0
    %386 = vmatprep.subr.mxu0 0.0
    %387 = vmatpush2.msra.mxu0 0.0
    %388 = vmatprep.subr.mxu0 0.0
    %389 = vmatpush2.msra.mxu0 0.0
    %390 = vmatprep.subr.mxu0 0.0
    %391 = vmatpush2.msra.mxu0 0.0
    %392 = vmatprep.subr.mxu0 0.0
    %393 = vmatpush2.msra.mxu0 0.0
    %394 = vmatprep.subr.mxu0 0.0
    %395 = vmatpush2.msra.mxu0 0.0
    %396 = vmatprep.subr.mxu0 0.0
    %397 = vmatpush2.msra.mxu0 0.0
    %398 = vmatprep.subr.mxu0 0.0
    %399 = vmatpush2.msra.mxu0 0.0
    %400 = vmatprep.subr.mxu0 0.0
    %401 = vmatpush2.msra.mxu0 0.0
    %402 = vmatprep.mubr.f32.mxu0 0.0
    %403 = vmatmul.mubr.f32.gmra.mxu0 %v314
    %v404 = vpop.f32.mrf.mxu0
    %v405 = vadd.f32 %v336, %v404
    %v406 = vpop.f32.mrf.mxu0
    %407 = vdwg.mxu0
    %408 = vst [vmem:[#allocation2] sm:$0xff] %v405
    // Predicated region
    $region38: #{linear_net_forward.1} parent=1 // pred_check
      _
    $region39: #{linear_net_forward.1} parent=1 // pred_check_branch
      %410 = sbr.rel (0) target = $region41
    $region40: #{linear_net_forward.1} parent=1 // pred_region
      %s412 = ssub.s32 128, 128
      %413 = vsyncadd [#allocation3], %s412
      %s415 = sshll.u32 [#allocation2], 4
      %s416 = int_to_ptr.vmem [resolvable:$true] %s415
      %418 = dma.vmem_to_hbm [thread:$0]  %s416, 128, %s9, [#allocation3]
    $region41: #{linear_net_forward.1} parent=1 // pred_fallthru
      _
    // Predicated region
    $region42: #{linear_net_forward.1} parent=1 // pred_check
      _
    $region43: #{linear_net_forward.1} parent=1 // pred_check_branch
      %420 = sbr.rel (0) target = $region45
    $region44: #{linear_net_forward.1} parent=1 // pred_region
      %421 = dma.done [#allocation3], 128
    $region45: #{linear_net_forward.1} parent=1 // pred_fallthru
      _
    %422 = vsyncpa [#allocation3], 1

</llo_original>
